<compile_context>
chip_gen: v5e
topology: v5e:2x2
jax: 0.10.0
libtpu: 0.0.40
codegen_flags: <defaults>
</compile_context>

<pallas_src>
import functools

import jax
import jax.numpy as jnp
from jax import lax
from jax.experimental import pallas as pl
from jax.experimental.pallas import tpu as pltpu

BN_EPS = 1e-5


def _round_up(x, m):
    return ((x + m - 1) // m) * m


def _pad_to(a, shape):
    pads = [(0, t - s) for s, t in zip(a.shape, shape)]
    if all(p == (0, 0) for p in pads):
        return a
    return jnp.pad(a, pads)


def mlp_kernel(x_ref, w1_ref, bn_ref, w2_ref, b2_ref, o_ref, acc_ref, *,
               inv_batch):
    j = pl.program_id(2)                       # hidden-slab index (reduction)

    @pl.when(j == 0)
    def _init():
        acc_ref[...] = jnp.zeros_like(acc_ref)

    # ---- Linear 1 slab: [B, dim] @ [dim, TH]  (MXU, f32 accumulation) ------
    # No bias: training-mode BatchNorm1d cancels a per-feature pre-bias exactly.
    h = jnp.dot(x_ref[...], w1_ref[...], preferred_element_type=jnp.float32)

    # ---- BatchNorm1d (training mode, biased var), two-pass, all f32 --------
    bn = bn_ref[...]                           # (2, TH): row0=gamma, row1=beta
    gamma = bn[0:1, :]
    beta = bn[1:2, :]
    mean = jnp.sum(h, axis=0, keepdims=True) * inv_batch          # [1, TH]
    centered = h - mean
    var = jnp.sum(centered * centered, axis=0, keepdims=True) * inv_batch
    scale = gamma * lax.rsqrt(var + BN_EPS)                       # EUP slot

    # ---- ReLU(BN(h)) --------------------------------------------------------
    h_act = jnp.maximum(centered * scale + beta, 0.0)

    # ---- Linear 2 slab: accumulate [B, TH] @ [TH, TP] into f32 scratch -----
    acc_ref[...] += jnp.dot(h_act.astype(w2_ref.dtype), w2_ref[...],
                            preferred_element_type=jnp.float32)

    @pl.when(j == pl.num_programs(2) - 1)
    def _finalize():
        o_ref[...] = (acc_ref[...] + b2_ref[...]).astype(o_ref.dtype)


def mlp_forward(x, w1, b1, gamma, beta, w2, b2, *,
                block_h=1024, block_p=1024,
                matmul_dtype=jnp.bfloat16, out_dtype=None, num_cores=1):
    """Fused MLP forward.

    Weights stored [in, out]; biases / BN params [1, F].  `b1` is accepted for
    API parity with the PyTorch module but is NOT sent to the kernel: training
    mode BatchNorm1d cancels it exactly.
    """
    del b1  # mathematically cancelled by train-mode BN (mean shift only)

    B, DIM = x.shape
    H = w1.shape[1]
    P = w2.shape[1]
    num_cores = max(int(num_cores), 1)
    out_dtype = x.dtype if out_dtype is None else out_dtype
    mm_bytes = jnp.dtype(matmul_dtype).itemsize
    out_bytes = jnp.dtype(out_dtype).itemsize

    # --- tile sizes (lane-dense: multiples of 128 on the last dims) ---------
    TH = min(_round_up(block_h, 128), _round_up(H, 128))
    P_pad128 = _round_up(P, 128)

    # Prefer a single proj tile: avoids recomputing matmul1 + BN + the whole
    # w1 stream per proj tile.  Only split proj if the accumulator + w2 slab
    # + output blocks would be too big (conservative cap fits v7x's 64 MiB).
    single_tile_bytes = (B * P_pad128 * 4                 # f32 accumulator
                         + 2 * TH * P_pad128 * mm_bytes   # w2 slab (dbl-buf)
                         + 2 * B * P_pad128 * out_bytes)  # output (dbl-buf)
    if single_tile_bytes <= (24 << 20):
        TP = P_pad128
    else:
        # TODO(synk): when proj is tiled, matmul1/BN are recomputed per proj
        # tile; keep h_act in a VMEM scratch and loop proj tiles in-kernel.
        TP = min(_round_up(block_p, 128), P_pad128)
    P_pad = _round_up(P_pad128, TP)

    # Hidden padding: multiple of TH * num_cores so slabs split evenly.
    H_pad = _round_up(H, TH * num_cores)
    n_h = H_pad // TH
    n_h_per_core = n_h // num_cores
    n_p = P_pad // TP

    # --- pad params (padded hidden/proj columns contribute exactly 0) and
    # --- cast the matmul operands ONCE here (bf16 halves the weight DMAs) ---
    x_m = x.astype(matmul_dtype)
    w1_p = _pad_to(w1, (DIM, H_pad)).astype(matmul_dtype)
    bn_p = _pad_to(jnp.concatenate([gamma, beta], axis=0), (2, H_pad))  # f32
    w2_p = _pad_to(w2, (H_pad, P_pad)).astype(matmul_dtype)
    b2_p = _pad_to(b2, (1, P_pad))
    if num_cores > 1:
        b2_p = b2_p / num_cores          # per-core partials each add b2/N

    grid = (num_cores, n_p, n_h_per_core)   # (parallel, parallel, reduction)

    # --- derive the VMEM budget from the actual (double-buffered) blocks ----
    vmem_bytes = (2 * B * DIM * mm_bytes            # x
                  + 2 * DIM * TH * mm_bytes         # w1 slab
                  + 2 * 2 * TH * 4                  # packed gamma/beta
                  + 2 * TH * TP * mm_bytes          # w2 slab
                  + 2 * TP * 4                      # b2
                  + 2 * B * TP * out_bytes          # output block
                  + B * TP * 4)                     # f32 accumulator scratch
    vmem_limit = min(int(vmem_bytes * 1.5) + (8 << 20), 100 << 20)

    kernel = functools.partial(mlp_kernel, inv_batch=1.0 / B)

    out_padded = pl.pallas_call(
        kernel,
        out_shape=jax.ShapeDtypeStruct((num_cores, B, P_pad), out_dtype),
        grid_spec=pltpu.PrefetchScalarGridSpec(
            num_scalar_prefetch=0,
            grid=grid,
            in_specs=[
                # x: fully resident, constant block
                pl.BlockSpec((B, DIM), lambda c, pj, j: (0, 0)),
                # w1 column slab (per-core offset into the hidden axis)
                pl.BlockSpec((DIM, TH),
                             lambda c, pj, j: (0, c * n_h_per_core + j)),
                # packed gamma/beta slab
                pl.BlockSpec((2, TH),
                             lambda c, pj, j: (0, c * n_h_per_core + j)),
                # w2 row slab
                pl.BlockSpec((TH, TP),
                             lambda c, pj, j: (c * n_h_per_core + j, pj)),
                # b2
                pl.BlockSpec((1, TP), lambda c, pj, j: (0, pj)),
            ],
            out_specs=pl.BlockSpec((None, B, TP), lambda c, pj, j: (c, 0, pj)),
            scratch_shapes=[pltpu.VMEM((B, TP), jnp.float32)],
        ),
        compiler_params=pltpu.CompilerParams(
            dimension_semantics=("parallel", "parallel", "arbitrary"),
            vmem_limit_bytes=vmem_limit,
        ),
    )(x_m, w1_p, bn_p, w2_p, b2_p)

    if num_cores == 1:
        out = out_padded[0]
    else:
        out = jnp.sum(out_padded, axis=0, dtype=jnp.float32).astype(out_dtype)
    return out[:, :P]


def init_params(key, dim, projection_size, hidden_size):
    """Deterministic synthetic parameter init (PyTorch-like uniform ranges)."""
    k1, k2, k3, k4 = jax.random.split(key, 4)
    bound1 = 1.0 / (dim ** 0.5)
    bound2 = 1.0 / (hidden_size ** 0.5)
    # stored as [in, out] (transpose of torch's Linear.weight)
    w1 = jax.random.uniform(k1, (dim, hidden_size), jnp.float32, -bound1, bound1)
    b1 = jax.random.uniform(k2, (1, hidden_size), jnp.float32, -bound1, bound1)
    gamma = jnp.ones((1, hidden_size), jnp.float32)   # BatchNorm1d weight init
    beta = jnp.zeros((1, hidden_size), jnp.float32)   # BatchNorm1d bias init
    w2 = jax.random.uniform(k3, (hidden_size, projection_size), jnp.float32,
                            -bound2, bound2)
    b2 = jax.random.uniform(k4, (1, projection_size), jnp.float32,
                            -bound2, bound2)
    return w1, b1, gamma, beta, w2, b2


def mlp_reference(x, w1, b1, gamma, beta, w2, b2):
    """Pure-JAX reference (PyTorch BatchNorm1d training-mode semantics)."""
    h = x @ w1 + b1
    mean = jnp.mean(h, axis=0, keepdims=True)
    var = jnp.mean((h - mean) ** 2, axis=0, keepdims=True)
    h = (h - mean) / jnp.sqrt(var + BN_EPS) * gamma + beta
    h = jnp.maximum(h, 0.0)
    return h @ w2 + b2


if __name__ == "__main__":
    # Small shapes consistent with MLP(dim, projection_size, hidden_size).
    # block_h=128 forces multiple hidden tiles to exercise the accumulator path.
    B, DIM, HIDDEN, PROJ = 8, 32, 256, 32

    key = jax.random.PRNGKey(0)
    kx, kp = jax.random.split(key)
    x = jax.random.normal(kx, (B, DIM), jnp.float32)
    params = init_params(kp, DIM, PROJ, HIDDEN)

    ref = mlp_reference(x, *params)

    # f32 matmul path, 2 hidden tiles: tight tolerance (also verifies the
    # b1-cancellation since the reference still applies b1).
    out_f32 = jax.block_until_ready(
        mlp_forward(x, *params, block_h=128, matmul_dtype=jnp.float32))
    assert out_f32.shape == (B, PROJ)
    assert jnp.allclose(out_f32, ref, atol=1e-4, rtol=1e-4), "f32 mismatch"

    # Dual-core hidden split (v7x-style), f32 path: still exact.
    out_2c = jax.block_until_ready(
        mlp_forward(x, *params, block_h=128, matmul_dtype=jnp.float32,
                    num_cores=2))
    assert out_2c.shape == (B, PROJ)
    assert jnp.allclose(out_2c, ref, atol=1e-4, rtol=1e-4), "2-core mismatch"

    # Default bf16 weight/x path (MXU + halved weight DMAs): relaxed tolerance
    # (batch stats are computed from the bf16 matmul output -- intentional).
    out_bf16 = jax.block_until_ready(mlp_forward(x, *params, block_h=128))
    assert out_bf16.shape == (B, PROJ)
    assert jnp.allclose(out_bf16, ref, atol=5e-2, rtol=5e-2), "bf16 mismatch"

    # Default tile sizes (single hidden tile) for coverage.
    out_def = jax.block_until_ready(mlp_forward(x, *params))
    assert out_def.shape == (B, PROJ)
    assert jnp.allclose(out_def, ref, atol=5e-2, rtol=5e-2), "default mismatch"

    print("KERNEL_OK")
</pallas_src>

<mosaic_0001>
module attributes {stable_mosaic.version = 11 : i64} {
  func.func @mlp_kernel(%arg0: i32, %arg1: i32, %arg2: i32, %arg3: memref<8x32xf32, #tpu.memory_space<vmem>>, %arg4: memref<32x128xf32, #tpu.memory_space<vmem>>, %arg5: memref<2x128xf32, #tpu.memory_space<vmem>>, %arg6: memref<128x128xf32, #tpu.memory_space<vmem>>, %arg7: memref<1x128xf32, #tpu.memory_space<vmem>>, %arg8: memref<1x8x128xf32, #tpu.memory_space<vmem>>, %arg9: memref<8x128xf32, #tpu.memory_space<vmem>>) attributes {dimension_semantics = [#tpu.dimension_semantics<parallel>, #tpu.dimension_semantics<parallel>, #tpu.dimension_semantics<arbitrary>], iteration_bounds = array<i64: 1, 1, 2>, scalar_prefetch = 0 : i64, scratch_operands = 1 : i64, tpu.core_type = #tpu.core_type<tc>, window_params = [{pipeline_mode = #tpu.pipeline_mode<synchronous>, transform_indices = @transform_0, window_bounds = array<i64: 8, 32>}, {transform_indices = @transform_1, window_bounds = array<i64: 32, 128>}, {transform_indices = @transform_2, window_bounds = array<i64: 2, 128>}, {transform_indices = @transform_3, window_bounds = array<i64: 128, 128>}, {transform_indices = @transform_4, window_bounds = array<i64: 1, 128>}, {transform_indices = @transform_5, window_bounds = array<i64: 1, 8, 128>}]} {
    %c0_i32 = arith.constant 0 : i32
    %0 = arith.cmpi eq, %arg2, %c0_i32 : i32
    %1 = arith.extui %0 : i1 to i32
    %c0_i32_0 = arith.constant 0 : i32
    %2 = arith.cmpi ne, %1, %c0_i32_0 : i32
    scf.if %2 {
      %cst_20 = arith.constant 0.000000e+00 : f32
      %38 = vector.broadcast %cst_20 : f32 to vector<8x128xf32>
      %c0_21 = arith.constant 0 : index
      %c0_22 = arith.constant 0 : index
      %39 = vector.load %arg9[%c0_21, %c0_22] : memref<8x128xf32, #tpu.memory_space<vmem>>, vector<8x128xf32>
      tpu.vector_store %arg9[%c0_21, %c0_22], %38 {strides = array<i32>} : memref<8x128xf32, #tpu.memory_space<vmem>>, vector<8x128xf32>,
    } else {
    }
    %c0 = arith.constant 0 : index
    %c0_1 = arith.constant 0 : index
    %3 = vector.load %arg3[%c0, %c0_1] : memref<8x32xf32, #tpu.memory_space<vmem>>, vector<8x32xf32>
    %c0_2 = arith.constant 0 : index
    %c0_3 = arith.constant 0 : index
    %4 = vector.load %arg4[%c0_2, %c0_3] : memref<32x128xf32, #tpu.memory_space<vmem>>, vector<32x128xf32>
    %cst = arith.constant dense<0.000000e+00> : vector<8x128xf32>
    %5 = tpu.matmul %3, %4, %cst {dimension_numbers = #tpu.dot_dimension_numbers<[1], [0], [0], [1], [0, 0, 1, 1], [], []>} : vector<8x32xf32>, vector<32x128xf32>, vector<8x128xf32> -> vector<8x128xf32>
    %c0_4 = arith.constant 0 : index
    %c0_5 = arith.constant 0 : index
    %6 = vector.load %arg5[%c0_4, %c0_5] : memref<2x128xf32, #tpu.memory_space<vmem>>, vector<2x128xf32>
    %7 = vector.extract_strided_slice %6 {offsets = [0, 0], sizes = [1, 128], strides = [1, 1]} : vector<2x128xf32> to vector<1x128xf32>
    %8 = vector.extract_strided_slice %6 {offsets = [1, 0], sizes = [1, 128], strides = [1, 1]} : vector<2x128xf32> to vector<1x128xf32>
    %cst_6 = arith.constant dense<0.000000e+00> : vector<128xf32>
    %9 = vector.multi_reduction <add>, %5, %cst_6 [0] : vector<8x128xf32> to vector<128xf32>
    %10 = vector.shape_cast %9 : vector<128xf32> to vector<1x128xf32>
    %cst_7 = arith.constant 1.250000e-01 : f32
    %11 = vector.broadcast %cst_7 : f32 to vector<1x128xf32>
    %12 = arith.mulf %10, %11 : vector<1x128xf32>
    %13 = vector.broadcast %12 : vector<1x128xf32> to vector<8x128xf32>
    %14 = arith.subf %5, %13 : vector<8x128xf32>
    %15 = arith.mulf %14, %14 : vector<8x128xf32>
    %cst_8 = arith.constant dense<0.000000e+00> : vector<128xf32>
    %16 = vector.multi_reduction <add>, %15, %cst_8 [0] : vector<8x128xf32> to vector<128xf32>
    %17 = vector.shape_cast %16 : vector<128xf32> to vector<1x128xf32>
    %cst_9 = arith.constant 1.250000e-01 : f32
    %18 = vector.broadcast %cst_9 : f32 to vector<1x128xf32>
    %19 = arith.mulf %17, %18 : vector<1x128xf32>
    %cst_10 = arith.constant 9.99999974E-6 : f32
    %20 = vector.broadcast %cst_10 : f32 to vector<1x128xf32>
    %21 = arith.addf %19, %20 : vector<1x128xf32>
    %22 = math.rsqrt %21 : vector<1x128xf32>
    %23 = arith.mulf %7, %22 : vector<1x128xf32>
    %24 = vector.broadcast %23 : vector<1x128xf32> to vector<8x128xf32>
    %25 = arith.mulf %14, %24 : vector<8x128xf32>
    %26 = vector.broadcast %8 : vector<1x128xf32> to vector<8x128xf32>
    %27 = arith.addf %25, %26 : vector<8x128xf32>
    %cst_11 = arith.constant 0.000000e+00 : f32
    %28 = vector.broadcast %cst_11 : f32 to vector<8x128xf32>
    %29 = arith.maximumf %27, %28 : vector<8x128xf32>
    %c0_12 = arith.constant 0 : index
    %c0_13 = arith.constant 0 : index
    %30 = vector.load %arg9[%c0_12, %c0_13] : memref<8x128xf32, #tpu.memory_space<vmem>>, vector<8x128xf32>
    %c0_14 = arith.constant 0 : index
    %c0_15 = arith.constant 0 : index
    %31 = vector.load %arg6[%c0_14, %c0_15] : memref<128x128xf32, #tpu.memory_space<vmem>>, vector<128x128xf32>
    %cst_16 = arith.constant dense<0.000000e+00> : vector<8x128xf32>
    %32 = tpu.matmul %29, %31, %cst_16 {dimension_numbers = #tpu.dot_dimension_numbers<[1], [0], [0], [1], [0, 0, 1, 1], [], []>} : vector<8x128xf32>, vector<128x128xf32>, vector<8x128xf32> -> vector<8x128xf32>
    %33 = arith.addf %30, %32 : vector<8x128xf32>
    %c0_17 = arith.constant 0 : index
    %c0_18 = arith.constant 0 : index
    %34 = vector.load %arg9[%c0_17, %c0_18] : memref<8x128xf32, #tpu.memory_space<vmem>>, vector<8x128xf32>
    tpu.vector_store %arg9[%c0_17, %c0_18], %33 {strides = array<i32>} : memref<8x128xf32, #tpu.memory_space<vmem>>, vector<8x128xf32>,
    %c1_i32 = arith.constant 1 : i32
    %35 = arith.cmpi eq, %arg2, %c1_i32 : i32
    %36 = arith.extui %35 : i1 to i32
    %c0_i32_19 = arith.constant 0 : i32
    %37 = arith.cmpi ne, %36, %c0_i32_19 : i32
    scf.if %37 {
      %c0_20 = arith.constant 0 : index
      %c0_21 = arith.constant 0 : index
      %38 = vector.load %arg9[%c0_20, %c0_21] : memref<8x128xf32, #tpu.memory_space<vmem>>, vector<8x128xf32>
      %c0_22 = arith.constant 0 : index
      %c0_23 = arith.constant 0 : index
      %39 = vector.load %arg7[%c0_22, %c0_23] : memref<1x128xf32, #tpu.memory_space<vmem>>, vector<1x128xf32>
      %40 = vector.broadcast %39 : vector<1x128xf32> to vector<8x128xf32>
      %41 = arith.addf %38, %40 : vector<8x128xf32>
      %c0_24 = arith.constant 0 : index
      %c0_25 = arith.constant 0 : index
      %c0_26 = arith.constant 0 : index
      %42 = vector.load %arg8[%c0_24, %c0_25, %c0_26] : memref<1x8x128xf32, #tpu.memory_space<vmem>>, vector<1x8x128xf32>
      %43 = vector.shape_cast %42 : vector<1x8x128xf32> to vector<8x128xf32>
      %44 = vector.shape_cast %41 : vector<8x128xf32> to vector<1x8x128xf32>
      tpu.vector_store %arg8[%c0_24, %c0_25, %c0_26], %44 {strides = array<i32>} : memref<1x8x128xf32, #tpu.memory_space<vmem>>, vector<1x8x128xf32>,
    } else {
    }
    return
  }
  func.func @transform_0(%arg0: i32, %arg1: i32, %arg2: i32) -> (i32, i32) {
    %c0_i32 = arith.constant 0 : i32
    %c0_i32_0 = arith.constant 0 : i32
    %c0_i32_1 = arith.constant 0 : i32
    return %c0_i32, %c0_i32_0 : i32, i32
  }
  func.func @transform_1(%arg0: i32, %arg1: i32, %arg2: i32) -> (i32, i32) {
    %c2_i32 = arith.constant 2 : i32
    %0 = arith.muli %arg0, %c2_i32 : i32
    %1 = arith.addi %0, %arg2 : i32
    %c0_i32 = arith.constant 0 : i32
    %c0_i32_0 = arith.constant 0 : i32
    return %c0_i32, %1 : i32, i32
  }
  func.func @transform_2(%arg0: i32, %arg1: i32, %arg2: i32) -> (i32, i32) {
    %c2_i32 = arith.constant 2 : i32
    %0 = arith.muli %arg0, %c2_i32 : i32
    %1 = arith.addi %0, %arg2 : i32
    %c0_i32 = arith.constant 0 : i32
    %c0_i32_0 = arith.constant 0 : i32
    return %c0_i32, %1 : i32, i32
  }
  func.func @transform_3(%arg0: i32, %arg1: i32, %arg2: i32) -> (i32, i32) {
    %c2_i32 = arith.constant 2 : i32
    %0 = arith.muli %arg0, %c2_i32 : i32
    %1 = arith.addi %0, %arg2 : i32
    %c0_i32 = arith.constant 0 : i32
    return %1, %arg1 : i32, i32
  }
  func.func @transform_4(%arg0: i32, %arg1: i32, %arg2: i32) -> (i32, i32) {
    %c0_i32 = arith.constant 0 : i32
    %c0_i32_0 = arith.constant 0 : i32
    return %c0_i32, %arg1 : i32, i32
  }
  func.func @transform_5(%arg0: i32, %arg1: i32, %arg2: i32) -> (i32, i32, i32) {
    %c0_i32 = arith.constant 0 : i32
    %c0_i32_0 = arith.constant 0 : i32
    return %arg0, %c0_i32, %arg1 : i32, i32, i32
  }
}

</mosaic_0001>

<llo_original>
// kernel: tpu_custom_call.1
$region0: #{tpu_custom_call.1}
  #allocation0 [shape = 'u32[]', space=smem, size = 0x4, offset = 0x4, fixed_abs, tag = 'smem constant byte address 0x4 - core index']
  #allocation1 [shape = 'u32[72,128]{1,0:T(1,128)}', space=vmem, size = 0x9000, scoped, tag = 'internal scratch']
  #allocation2 [shape = 'f32[8,128]{1,0:T(8,128)}', space=vmem, size = 0x1000, scoped, tag = 'scratch operand']
  %s0 = inlined_call_operand.hbm [shape: f32[8,32], index: 0, kind: input, shape index: {}]
  %s1 = inlined_call_operand.hbm [shape: f32[32,256], index: 1, kind: input, shape index: {}]
  %s2 = inlined_call_operand.hbm [shape: f32[2,256], index: 2, kind: input, shape index: {}]
  %s3 = inlined_call_operand.hbm [shape: f32[256,128], index: 3, kind: input, shape index: {}]
  %s4 = inlined_call_operand.vmem [shape: f32[1,128], index: 4, kind: input, shape index: {}]
  %s5 = inlined_call_operand.hbm [shape: f32[1,8,128], index: 5, kind: output, shape index: {}]
  %s6 = sld [smem:[#allocation0]]
  $region77: #{tpu_custom_call.1} parent=0
    _
  %s8 = ssub.s32 1, %s6
  %s9 = scalar_select 0, %s8, %s6
  $region1: #{tpu_custom_call.1} parent=0
    #allocation3 [shape = 'u8[4096]{0}', space=vmem, size = 0x1000, scoped, tag = 'input window, operand 0, single buffered']
    #allocation4 [shape = 's32[2]{0}', space=sflag, size = 0x8, scoped, tag = 'scoped memory for tpu_custom_call.1']
    #allocation5 [shape = 's32[2]{0}', space=sflag, size = 0x8, scoped, tag = 'scoped memory for tpu_custom_call.1']
    #allocation6 [shape = 'u8[32768]{0}', space=vmem, size = 0x8000, scoped, tag = 'input window, operand 1']
    #allocation7 [shape = 's32[2]{0}', space=sflag, size = 0x8, scoped, tag = 'scoped memory for tpu_custom_call.1']
    #allocation8 [shape = 'u8[2048]{0}', space=vmem, size = 0x800, scoped, tag = 'input window, operand 2']
    #allocation9 [shape = 'u8[131072]{0}', space=vmem, size = 0x20000, scoped, tag = 'input window, operand 3']
    #allocation10 [shape = 's32[2]{0}', space=sflag, size = 0x8, scoped, tag = 'scoped memory for tpu_custom_call.1']
    #allocation11 [shape = 'u8[4096]{0}', space=vmem, size = 0x1000, scoped, tag = 'output window, operand 0, single buffered']
    %10 = vsyncpa [#allocation4], 0
    %11 = vsyncpa [#allocation7], 0
    %s12 = scalar_lea.sflag [#allocation7], 1
    %13 = vsyncpa %s12, 0
    %14 = vsyncpa [#allocation10], 0
    %s15 = scalar_lea.sflag [#allocation10], 1
    %16 = vsyncpa %s15, 0
    %17 = vsyncpa [#allocation5], 0
    loop: start=0, step=1, limit=4
    $region2: #{tpu_custom_call.1} parent=1 // loop_pre_header
      _
    $region3: #{tpu_custom_call.1} parent=1 // loop_header
      %s19 = sphi 0, %s23
      %p20 = scmp.ge.s32.totalorder %s19, 4
      %s26 = sphi 0, %s45
      %s27 = sphi 0, %s41
      %s28 = sphi 0, %s37
      %s29 = sphi 0, %s26
      %s30 = sphi 0, %s27
      %s31 = sphi 0, %s28
      %s32 = sphi 0, %s29
      %s33 = sphi 0, %s30
      %s34 = sphi 0, %s31
      %s46 = sphi 0, %s46
      %s48 = sphi 0, %s46
      %s49 = sphi 0, %s48
      %s63 = sphi 0, %s49
      %s73 = sphi 0, %s75
      %s76 = sphi 0, %s73
      %s77 = sphi 0, %s76
      %s93 = sphi 0, %s77
      %s103 = sphi 0, %s105
      %s106 = sphi 0, %s103
      %s107 = sphi 0, %s106
      %s123 = sphi 0, %s107
      %s135 = sphi 0, %s137
      %s138 = sphi 0, %s135
      %s139 = sphi 0, %s138
      %s155 = sphi 0, %s139
      %s161 = sphi 0, %s163
      %s164 = sphi 0, %s161
      %s165 = sphi 0, %s164
      %s181 = sphi 0, %s165
      %s189 = sphi 0, %s191
      %s192 = sphi 0, %s189
      %s193 = sphi 0, %s192
      %s209 = sphi 0, %s193
    $region4: #{tpu_custom_call.1} parent=1 // loop_header_branch
      %22 = sbr.rel (%p20) target = $region8
    $region5: #{tpu_custom_call.1} parent=1 // loop_body
      %s24 = ssub.s32 %s19, 1
      %s25 = ssub.s32 %s19, 2
      %s35 = sadd.s32 1, %s28
      %p36 = scmp.ge.s32.totalorder %s35, 2
      %s37 = scalar_select %p36, 0, %s35
      %s38 = sadd.s32 1, %s27
      %s39 = scalar_select %p36, %s38, %s27
      %p40 = scmp.ge.s32.totalorder %s39, 1
      %s41 = scalar_select %p40, 0, %s39
      %s42 = sadd.s32 1, %s26
      %s43 = scalar_select %p40, %s42, %s26
      %p44 = scmp.ge.s32.totalorder %s43, 1
      %s45 = scalar_select %p44, 0, %s43
      %s47 = sadd.s32 %s46, 1
      %p50 = scmp.eq.s32.totalorder %s19, 1
      %p51 = scmp.ne.s32.totalorder %s46, %s48
      %p52 = scmp.eq.s32.totalorder %s19, 0
      %p53 = por %p51, %p52
      %p54 = scmp.ne.s32.totalorder %s46, %s48
      %p55 = scmp.eq.s32.totalorder %s24, 1
      %p56 = por %p54, %p55
      %p57 = scmp.ne.s32.totalorder %s48, %s49
      %p58 = scmp.eq.s32.totalorder %s24, 0
      %p59 = por %p57, %p58
      %p60 = scmp.ne.s32.totalorder %s48, %s49
      %p61 = scmp.eq.s32.totalorder %s25, 1
      %p62 = por %p60, %p61
      %p64 = scmp.ne.s32.totalorder %s49, %s63
      %p65 = scmp.eq.s32.totalorder %s25, 0
      %p66 = por %p64, %p65
      %s67 = smul.u32 %s26, 2
      %s68 = sadd.s32 %s67, %s28
      %s69 = smul.u32 %s45, 2
      %s70 = sadd.s32 %s69, %s37
      %s71 = ssub.s32 %s68, %s70
      %p72 = scmp.eq.s32.totalorder %s71, 0
      %s74 = sadd.s32 %s73, 1
      %s75 = scalar_select %p72, %s73, %s74
      %p78 = pneg %p72
      %p79 = scmp.eq.s32.totalorder %s19, 1
      %p80 = por %p78, %p79
      %p81 = scmp.ne.s32.totalorder %s73, %s76
      %p82 = scmp.eq.s32.totalorder %s19, 0
      %p83 = por %p81, %p82
      %p84 = scmp.ne.s32.totalorder %s73, %s76
      %p85 = scmp.eq.s32.totalorder %s24, 1
      %p86 = por %p84, %p85
      %p87 = scmp.ne.s32.totalorder %s76, %s77
      %p88 = scmp.eq.s32.totalorder %s24, 0
      %p89 = por %p87, %p88
      %p90 = scmp.ne.s32.totalorder %s76, %s77
      %p91 = scmp.eq.s32.totalorder %s25, 1
      %p92 = por %p90, %p91
      %p94 = scmp.ne.s32.totalorder %s77, %s93
      %p95 = scmp.eq.s32.totalorder %s25, 0
      %p96 = por %p94, %p95
      %s97 = smul.u32 %s26, 2
      %s98 = sadd.s32 %s97, %s28
      %s99 = smul.u32 %s45, 2
      %s100 = sadd.s32 %s99, %s37
      %s101 = ssub.s32 %s98, %s100
      %p102 = scmp.eq.s32.totalorder %s101, 0
      %s104 = sadd.s32 %s103, 1
      %s105 = scalar_select %p102, %s103, %s104
      %p108 = pneg %p102
      %p109 = scmp.eq.s32.totalorder %s19, 1
      %p110 = por %p108, %p109
      %p111 = scmp.ne.s32.totalorder %s103, %s106
      %p112 = scmp.eq.s32.totalorder %s19, 0
      %p113 = por %p111, %p112
      %p114 = scmp.ne.s32.totalorder %s103, %s106
      %p115 = scmp.eq.s32.totalorder %s24, 1
      %p116 = por %p114, %p115
      %p117 = scmp.ne.s32.totalorder %s106, %s107
      %p118 = scmp.eq.s32.totalorder %s24, 0
      %p119 = por %p117, %p118
      %p120 = scmp.ne.s32.totalorder %s106, %s107
      %p121 = scmp.eq.s32.totalorder %s25, 1
      %p122 = por %p120, %p121
      %p124 = scmp.ne.s32.totalorder %s107, %s123
      %p125 = scmp.eq.s32.totalorder %s25, 0
      %p126 = por %p124, %p125
      %s127 = smul.u32 %s26, 2
      %s128 = sadd.s32 %s127, %s28
      %s129 = smul.u32 %s45, 2
      %s130 = sadd.s32 %s129, %s37
      %s131 = ssub.s32 %s128, %s130
      %s132 = ssub.s32 %s27, %s41
      %s133 = sor.u32 %s131, %s132
      %p134 = scmp.eq.s32.totalorder %s133, 0
      %s136 = sadd.s32 %s135, 1
      %s137 = scalar_select %p134, %s135, %s136
      %p140 = pneg %p134
      %p141 = scmp.eq.s32.totalorder %s19, 1
      %p142 = por %p140, %p141
      %p143 = scmp.ne.s32.totalorder %s135, %s138
      %p144 = scmp.eq.s32.totalorder %s19, 0
      %p145 = por %p143, %p144
      %p146 = scmp.ne.s32.totalorder %s135, %s138
      %p147 = scmp.eq.s32.totalorder %s24, 1
      %p148 = por %p146, %p147
      %p149 = scmp.ne.s32.totalorder %s138, %s139
      %p150 = scmp.eq.s32.totalorder %s24, 0
      %p151 = por %p149, %p150
      %p152 = scmp.ne.s32.totalorder %s138, %s139
      %p153 = scmp.eq.s32.totalorder %s25, 1
      %p154 = por %p152, %p153
      %p156 = scmp.ne.s32.totalorder %s139, %s155
      %p157 = scmp.eq.s32.totalorder %s25, 0
      %p158 = por %p156, %p157
      %s159 = ssub.s32 %s27, %s41
      %p160 = scmp.eq.s32.totalorder %s159, 0
      %s162 = sadd.s32 %s161, 1
      %s163 = scalar_select %p160, %s161, %s162
      %p166 = pneg %p160
      %p167 = scmp.eq.s32.totalorder %s19, 1
      %p168 = por %p166, %p167
      %p169 = scmp.ne.s32.totalorder %s161, %s164
      %p170 = scmp.eq.s32.totalorder %s19, 0
      %p171 = por %p169, %p170
      %p172 = scmp.ne.s32.totalorder %s161, %s164
      %p173 = scmp.eq.s32.totalorder %s24, 1
      %p174 = por %p172, %p173
      %p175 = scmp.ne.s32.totalorder %s164, %s165
      %p176 = scmp.eq.s32.totalorder %s24, 0
      %p177 = por %p175, %p176
      %p178 = scmp.ne.s32.totalorder %s164, %s165
      %p179 = scmp.eq.s32.totalorder %s25, 1
      %p180 = por %p178, %p179
      %p182 = scmp.ne.s32.totalorder %s165, %s181
      %p183 = scmp.eq.s32.totalorder %s25, 0
      %p184 = por %p182, %p183
      %s185 = ssub.s32 %s26, %s45
      %s186 = ssub.s32 %s27, %s41
      %s187 = sor.u32 %s185, %s186
      %p188 = scmp.eq.s32.totalorder %s187, 0
      %s190 = sadd.s32 %s189, 1
      %s191 = scalar_select %p188, %s189, %s190
      %p194 = pneg %p188
      %p195 = scmp.eq.s32.totalorder %s19, 1
      %p196 = por %p194, %p195
      %p197 = scmp.ne.s32.totalorder %s189, %s192
      %p198 = scmp.eq.s32.totalorder %s19, 0
      %p199 = por %p197, %p198
      %p200 = scmp.ne.s32.totalorder %s189, %s192
      %p201 = scmp.eq.s32.totalorder %s24, 1
      %p202 = por %p200, %p201
      %p203 = scmp.ne.s32.totalorder %s192, %s193
      %p204 = scmp.eq.s32.totalorder %s24, 0
      %p205 = por %p203, %p204
      %p206 = scmp.ne.s32.totalorder %s192, %s193
      %p207 = scmp.eq.s32.totalorder %s25, 1
      %p208 = por %p206, %p207
      %p210 = scmp.ne.s32.totalorder %s193, %s209
      %p211 = scmp.eq.s32.totalorder %s25, 0
      %p212 = por %p210, %p211
      %p213 = scmp.le.s32.totalorder 1, %s19
      %p214 = scmp.lt.s32.totalorder %s19, 3
      %p215 = pnand %p213, %p214
      %p216 = pneg %p215
      // Predicated region
      $region9: #{tpu_custom_call.1} parent=5 // pred_check
        _
      $region10: #{tpu_custom_call.1} parent=5 // pred_check_branch
        %218 = sbr.rel (%p215) target = $region12
      $region11: #{tpu_custom_call.1} parent=5 // pred_region
        %s219 = ssub.s32 %s19, 1
        // Predicated region
        $region13: #{tpu_custom_call.1} parent=11 // pred_check
          %p220 = pneg %p59
        $region14: #{tpu_custom_call.1} parent=11 // pred_check_branch
          %222 = sbr.rel (%p220) target = $region16
        $region15: #{tpu_custom_call.1} parent=11 // pred_region
          %224 = vsyncadd [#allocation4], 0
          %s226 = sshll.u32 %s0, 4
          %s227 = int_to_ptr.hbm [resolvable:$true] %s226
          %s228 = sshll.u32 [#allocation3], 4
          %s229 = int_to_ptr.vmem [resolvable:$true] %s228
          %231 = dma.hbm_to_vmem [thread:$0]  %s227, 128, %s229, [#allocation4]
        $region16: #{tpu_custom_call.1} parent=11 // pred_fallthru
          _
        // Predicated region
        $region17: #{tpu_custom_call.1} parent=11 // pred_check
          %p232 = pneg %p177
        $region18: #{tpu_custom_call.1} parent=11 // pred_check_branch
          %234 = sbr.rel (%p232) target = $region20
        $region19: #{tpu_custom_call.1} parent=11 // pred_region
          %p235 = scmp.lt.s32.totalorder %s30, 0
          %s236 = scalar_select %p235, %s30, 0
          %s237 = scalar_lea.vmem %s4, %s236
        $region20: #{tpu_custom_call.1} parent=11 // pred_fallthru
          _
      $region12: #{tpu_custom_call.1} parent=5 // pred_fallthru
        _
      %p238 = scmp.lt.s32.totalorder %s19, 2
      // Predicated region
      $region21: #{tpu_custom_call.1} parent=5 // pred_check
        %p239 = pneg %p238
      $region22: #{tpu_custom_call.1} parent=5 // pred_check_branch
        %241 = sbr.rel (%p239) target = $region24
      $region23: #{tpu_custom_call.1} parent=5 // pred_region
        // Predicated region
        $region25: #{tpu_custom_call.1} parent=23 // pred_check
          %p242 = pneg %p83
        $region26: #{tpu_custom_call.1} parent=23 // pred_check_branch
          %244 = sbr.rel (%p242) target = $region28
        $region27: #{tpu_custom_call.1} parent=23 // pred_region
          %s245 = sand.u32 %s19, 1
          %s246 = scalar_lea.sflag [#allocation7], %s245
          %s247 = sand.u32 %s73, 1
          %s248 = smul.addr %s247, 32
          %s249 = scalar_lea.vmem [#allocation6], %s248
          %s250 = smul.u32 %s26, 2
          %s251 = sadd.s32 %s250, %s28
          %253 = vsyncadd %s246, 0
          %s254 = smul.addr %s251, 8
          %s255 = scalar_lea.hbm %s1, %s254
          %s256 = sshll.u32 %s255, 4
          %s257 = int_to_ptr.hbm [resolvable:$true] %s256
          %s258 = sshll.u32 %s249, 4
          %s259 = int_to_ptr.vmem [resolvable:$true] %s258
          %264 = dma.hbm_to_vmem [thread:$0]  %s257, 512, %s259, %s246, 256, 128, 8
        $region28: #{tpu_custom_call.1} parent=23 // pred_fallthru
          _
        // Predicated region
        $region29: #{tpu_custom_call.1} parent=23 // pred_check
          %p265 = pneg %p113
        $region30: #{tpu_custom_call.1} parent=23 // pred_check_branch
          %267 = sbr.rel (%p265) target = $region32
        $region31: #{tpu_custom_call.1} parent=23 // pred_region
          %s268 = sand.u32 %s19, 1
          %s269 = scalar_lea.sflag [#allocation7], %s268
          %s270 = sand.u32 %s103, 1
          %s271 = smul.addr %s270, 2
          %s272 = scalar_lea.vmem [#allocation8], %s271
          %s273 = smul.u32 %s26, 2
          %s274 = sadd.s32 %s273, %s28
          %276 = vsyncadd %s269, 0
          %s277 = smul.addr %s274, 2
          %s278 = scalar_lea.hbm %s2, %s277
          %s280 = sshll.u32 %s278, 4
          %s281 = int_to_ptr.hbm [resolvable:$true] %s280
          %s282 = sshll.u32 %s272, 4
          %s283 = int_to_ptr.vmem [resolvable:$true] %s282
          %285 = dma.hbm_to_vmem [thread:$0]  %s281, 32, %s283, %s269
        $region32: #{tpu_custom_call.1} parent=23 // pred_fallthru
          _
        // Predicated region
        $region33: #{tpu_custom_call.1} parent=23 // pred_check
          %p286 = pneg %p145
        $region34: #{tpu_custom_call.1} parent=23 // pred_check_branch
          %288 = sbr.rel (%p286) target = $region36
        $region35: #{tpu_custom_call.1} parent=23 // pred_region
          %s289 = sand.u32 %s135, 1
          %s290 = scalar_lea.sflag [#allocation10], %s289
          %s291 = sand.u32 %s135, 1
          %s292 = smul.addr %s291, 128
          %s293 = scalar_lea.vmem [#allocation9], %s292
          %s294 = smul.u32 %s26, 2
          %s295 = sadd.s32 %s294, %s28
          %s296 = smul.u32 16, %s295
          %298 = vsyncadd %s290, 0
          %s299 = sadd.s32 %s27, %s296
          %s300 = smul.addr %s299, 8
          %s301 = scalar_lea.hbm %s3, %s300
          %s302 = sshll.u32 %s301, 4
          %s303 = int_to_ptr.hbm [resolvable:$true] %s302
          %s304 = sshll.u32 %s293, 4
          %s305 = int_to_ptr.vmem [resolvable:$true] %s304
          %310 = dma.hbm_to_vmem [thread:$0]  %s303, 2048, %s305, %s290, 128, 128, 8
        $region36: #{tpu_custom_call.1} parent=23 // pred_fallthru
          _
      $region24: #{tpu_custom_call.1} parent=5 // pred_fallthru
        _
      %p311 = scmp.le.s32.totalorder 1, %s19
      %p312 = scmp.lt.s32.totalorder %s19, 3
      %p313 = pnand %p311, %p312
      %p314 = pneg %p313
      // Predicated region
      $region37: #{tpu_custom_call.1} parent=5 // pred_check
        _
      $region38: #{tpu_custom_call.1} parent=5 // pred_check_branch
        %316 = sbr.rel (%p313) target = $region40
      $region39: #{tpu_custom_call.1} parent=5 // pred_region
        %s317 = ssub.s32 %s19, 1
        // Predicated region
        $region41: #{tpu_custom_call.1} parent=39 // pred_check
          %p318 = pneg %p59
        $region42: #{tpu_custom_call.1} parent=39 // pred_check_branch
          %320 = sbr.rel (%p318) target = $region44
        $region43: #{tpu_custom_call.1} parent=39 // pred_region
          %322 = dma.done [#allocation4], 128
        $region44: #{tpu_custom_call.1} parent=39 // pred_fallthru
          _
        %s323 = sand.u32 %s24, 1
        %s324 = scalar_lea.sflag [#allocation7], %s323
        %s325 = sand.u32 %s76, 1
        %s326 = smul.addr %s325, 32
        %s327 = scalar_lea.vmem [#allocation6], %s326
        // Predicated region
        $region45: #{tpu_custom_call.1} parent=39 // pred_check
          %p328 = pneg %p89
        $region46: #{tpu_custom_call.1} parent=39 // pred_check_branch
          %330 = sbr.rel (%p328) target = $region48
        $region47: #{tpu_custom_call.1} parent=39 // pred_region
          %332 = dma.done %s324, 512
        $region48: #{tpu_custom_call.1} parent=39 // pred_fallthru
          _
        %s333 = sand.u32 %s24, 1
        %s334 = scalar_lea.sflag [#allocation7], %s333
        %s335 = sand.u32 %s106, 1
        %s336 = smul.addr %s335, 2
        %s337 = scalar_lea.vmem [#allocation8], %s336
        // Predicated region
        $region49: #{tpu_custom_call.1} parent=39 // pred_check
          %p338 = pneg %p119
        $region50: #{tpu_custom_call.1} parent=39 // pred_check_branch
          %340 = sbr.rel (%p338) target = $region52
        $region51: #{tpu_custom_call.1} parent=39 // pred_region
          %342 = dma.done %s334, 32
        $region52: #{tpu_custom_call.1} parent=39 // pred_fallthru
          _
        %s343 = sand.u32 %s138, 1
        %s344 = scalar_lea.sflag [#allocation10], %s343
        %s345 = sand.u32 %s138, 1
        %s346 = smul.addr %s345, 128
        %s347 = scalar_lea.vmem [#allocation9], %s346
        // Predicated region
        $region53: #{tpu_custom_call.1} parent=39 // pred_check
          %p348 = pneg %p151
        $region54: #{tpu_custom_call.1} parent=39 // pred_check_branch
          %350 = sbr.rel (%p348) target = $region56
        $region55: #{tpu_custom_call.1} parent=39 // pred_region
          %352 = dma.done %s344, 2048
        $region56: #{tpu_custom_call.1} parent=39 // pred_fallthru
          _
        %p353 = pneg %p59
        %p354 = pneg %p56
        %s355 = sand.u32 %s24, 1
        %s356 = scalar_lea.sflag [#allocation7], %s355
        %s357 = sand.u32 %s76, 1
        %s358 = smul.addr %s357, 32
        %s359 = scalar_lea.vmem [#allocation6], %s358
        %p360 = pneg %p89
        %p361 = pneg %p86
        %s362 = sand.u32 %s24, 1
        %s363 = scalar_lea.sflag [#allocation7], %s362
        %s364 = sand.u32 %s106, 1
        %s365 = smul.addr %s364, 2
        %s366 = scalar_lea.vmem [#allocation8], %s365
        %p367 = pneg %p119
        %p368 = pneg %p116
        %s369 = sand.u32 %s138, 1
        %s370 = scalar_lea.sflag [#allocation10], %s369
        %s371 = sand.u32 %s138, 1
        %s372 = smul.addr %s371, 128
        %s373 = scalar_lea.vmem [#allocation9], %s372
        %p374 = pneg %p151
        %p375 = pneg %p148
        %p376 = scmp.lt.s32.totalorder %s30, 0
        %s377 = scalar_select %p376, %s30, 0
        %s378 = scalar_lea.vmem %s4, %s377
        %p379 = pneg %p177
        %p380 = pneg %p174
        %p381 = pneg %p205
        %p382 = pneg %p202
        %s383 = smul.u32 %s29, 2
        %s384 = sadd.s32 %s383, %s31
        %s385 = smul.u32 %s29, 2
        %s386 = sadd.s32 %s385, %s31
        %s387 = smul.u32 %s29, 2
        %s388 = sadd.s32 %s387, %s31
        %s389 = smul.u32 16, %s388
        %p390 = scmp.lt.s32.totalorder %s30, 0
        %s391 = scalar_select %p390, %s30, 0
        %s392 = scalar_lea.vmem %s4, %s391
        %p393 = scmp.eq.s32.totalorder %s31, 0
        // Predicated region
        $region57: #{tpu_custom_call.1} parent=39 // pred_check
          %p394 = pneg %p393
        $region58: #{tpu_custom_call.1} parent=39 // pred_check_branch
          %396 = sbr.rel (%p394) target = $region60
        $region59: #{tpu_custom_call.1} parent=39 // pred_region
          %397 = vst [vmem:[#allocation2] sm:$0xff] 0.0
        $region60: #{tpu_custom_call.1} parent=39 // pred_fallthru
          _
        %v398 = vld [vmem:[#allocation3] sm:$0xff]
        %v399 = vld [vmem:[%s327] sm:$0xff]
        %v400 = vld [vmem:[%s327 + $0x8] sm:$0xff]
        %v401 = vld [vmem:[%s327 + $0x10] sm:$0xff]
        %v402 = vld [vmem:[%s327 + $0x18] sm:$0xff]
        %vm403 = vcmask 261120
        %v405 = vsel %vm403, %v398, 0
        %407 = vmatpush.msra.mxu0 0.0
        %408 = vmatpush.msra.mxu0 0.0
        %409 = vmatpush.msra.mxu0 0.0
        %410 = vmatpush.msra.mxu0 0.0
        %411 = vmatpush.msra.mxu0 0.0
        %412 = vmatpush.msra.mxu0 0.0
        %413 = vmatpush.msra.mxu0 0.0
        %414 = vmatpush.msra.mxu0 0.0
        %415 = vmatpush.msra.mxu0 0.0
        %416 = vmatpush.msra.mxu0 0.0
        %417 = vmatpush.msra.mxu0 0.0
        %418 = vmatpush.msra.mxu0 0.0
        %419 = vmatpush.msra.mxu0 %v402
        %420 = vmatpush.msra.mxu0 %v401
        %421 = vmatpush.msra.mxu0 %v400
        %422 = vmatpush.msra.mxu0 %v399
        %423 = vmatmul.f32.gmra.mxu0 %v405
        %v424 = vpop.f32.mrf.mxu0
        %v425 = vadd.f32 0.0, %v424
        %426 = vdwg.mxu0
        %v427 = vld [vmem:[%s337] sm:$0x3]
        %v428 = vrot.slane %v425, 4
        %v429 = vadd.f32 %v425, %v428
        %v430 = vrot.slane %v429, 2
        %v431 = vadd.f32 %v429, %v430
        %v432 = vrot.slane %v431, 1
        %v433 = vadd.f32 %v431, %v432
        %v434 = vmul.f32 %v433, 0.125
        %v435 = vsub.f32 %v425, %v434
        %v436 = vmul.f32 %v435, %v435
        %v437 = vrot.slane %v436, 4
        %v438 = vadd.f32 %v436, %v437
        %v439 = vrot.slane %v438, 2
        %v440 = vadd.f32 %v438, %v439
        %v441 = vrot.slane %v440, 1
        %v442 = vadd.f32 %v440, %v441
        %v443 = vmul.f32 %v442, 0.125
        %v444 = vadd.f32 %v443, 1e-05
        %v445 = vrsqrt.pop %v444
        %v446 = vmul.f32 %v445, %v444
        %v447 = vmul.f32 %v446, %v445
        %v448 = vmul.f32 0.5, %v447
        %v449 = vsub.f32 1.5, %v448
        %v450 = vmul.f32 %v445, %v449
        %vm451 = vweird.f32 %v444
        %vm452 = vweird.f32 %v445
        %vm453 = vmor %vm451, %vm452
        %v454 = vsel %vm453, %v445, %v450
        %v455 = vmul.f32 %v427, %v454
        %v456 = vperm.slane %v455, 0
        %v457 = vmul.f32 %v435, %v456
        %v458 = vperm.slane %v427, 1
        %v459 = vadd.f32 %v457, %v458
        %v460 = vmax.f32 %v459, 0.0
        %v461 = vld [vmem:[#allocation2] sm:$0xff]
        %v462 = vld [vmem:[%s347] sm:$0xff]
        %v463 = vld [vmem:[%s347 + $0x8] sm:$0xff]
        %v464 = vld [vmem:[%s347 + $0x10] sm:$0xff]
        %v465 = vld [vmem:[%s347 + $0x18] sm:$0xff]
        %v466 = vld [vmem:[%s347 + $0x20] sm:$0xff]
        %v467 = vld [vmem:[%s347 + $0x28] sm:$0xff]
        %v468 = vld [vmem:[%s347 + $0x30] sm:$0xff]
        %v469 = vld [vmem:[%s347 + $0x38] sm:$0xff]
        %v470 = vld [vmem:[%s347 + $0x40] sm:$0xff]
        %v471 = vld [vmem:[%s347 + $0x48] sm:$0xff]
        %v472 = vld [vmem:[%s347 + $0x50] sm:$0xff]
        %v473 = vld [vmem:[%s347 + $0x58] sm:$0xff]
        %v474 = vld [vmem:[%s347 + $0x60] sm:$0xff]
        %v475 = vld [vmem:[%s347 + $0x68] sm:$0xff]
        %v476 = vld [vmem:[%s347 + $0x70] sm:$0xff]
        %v477 = vld [vmem:[%s347 + $0x78] sm:$0xff]
        %478 = vmatpush.msra.mxu0 %v477
        %479 = vmatpush.msra.mxu0 %v476
        %480 = vmatpush.msra.mxu0 %v475
        %481 = vmatpush.msra.mxu0 %v474
        %482 = vmatpush.msra.mxu0 %v473
        %483 = vmatpush.msra.mxu0 %v472
        %484 = vmatpush.msra.mxu0 %v471
        %485 = vmatpush.msra.mxu0 %v470
        %486 = vmatpush.msra.mxu0 %v469
        %487 = vmatpush.msra.mxu0 %v468
        %488 = vmatpush.msra.mxu0 %v467
        %489 = vmatpush.msra.mxu0 %v466
        %490 = vmatpush.msra.mxu0 %v465
        %491 = vmatpush.msra.mxu0 %v464
        %492 = vmatpush.msra.mxu0 %v463
        %493 = vmatpush.msra.mxu0 %v462
        %494 = vmatmul.f32.gmra.mxu0 %v460
        %v495 = vpop.f32.mrf.mxu0
        %v496 = vadd.f32 0.0, %v495
        %497 = vdwg.mxu0
        %v498 = vadd.f32 %v461, %v496
        %499 = vst [vmem:[#allocation2] sm:$0xff] %v498
        %p500 = scmp.eq.s32.totalorder %s31, 1
        // Predicated region
        $region61: #{tpu_custom_call.1} parent=39 // pred_check
          %p501 = pneg %p500
        $region62: #{tpu_custom_call.1} parent=39 // pred_check_branch
          %503 = sbr.rel (%p501) target = $region64
        $region63: #{tpu_custom_call.1} parent=39 // pred_region
          %v504 = vld [vmem:[#allocation2] sm:$0xff]
          %v505 = vld [vmem:[%s392] sm:$0x1]
          %v507 = vperm.slane %v505, 0
          %v509 = vadd.f32 %v504, %v507
          %510 = vst [vmem:[#allocation11] sm:$0xff] %v509
        $region64: #{tpu_custom_call.1} parent=39 // pred_fallthru
          _
        // Predicated region
        $region65: #{tpu_custom_call.1} parent=39 // pred_check
          %p511 = pneg %p202
        $region66: #{tpu_custom_call.1} parent=39 // pred_check_branch
          %513 = sbr.rel (%p511) target = $region68
        $region67: #{tpu_custom_call.1} parent=39 // pred_region
          %515 = vsyncadd [#allocation5], 0
          %s516 = sadd.s32 %s30, %s29
          %s517 = smul.addr %s516, 8
          %s518 = scalar_lea.hbm %s5, %s517
          %s520 = sshll.u32 [#allocation11], 4
          %s521 = int_to_ptr.vmem [resolvable:$true] %s520
          %s522 = sshll.u32 %s518, 4
          %s523 = int_to_ptr.hbm [resolvable:$true] %s522
          %525 = dma.vmem_to_hbm [thread:$0]  %s521, 128, %s523, [#allocation5]
        $region68: #{tpu_custom_call.1} parent=39 // pred_fallthru
          _
        // Predicated region
        $region69: #{tpu_custom_call.1} parent=39 // pred_check
          %p526 = pneg %p202
        $region70: #{tpu_custom_call.1} parent=39 // pred_check_branch
          %528 = sbr.rel (%p526) target = $region72
        $region71: #{tpu_custom_call.1} parent=39 // pred_region
          %530 = dma.done [#allocation5], 128
        $region72: #{tpu_custom_call.1} parent=39 // pred_fallthru
          _
      $region40: #{tpu_custom_call.1} parent=5 // pred_fallthru
        _
      %p531 = scmp.le.s32.totalorder 2, %s19
      // Predicated region
      $region73: #{tpu_custom_call.1} parent=5 // pred_check
        %p532 = pneg %p531
      $region74: #{tpu_custom_call.1} parent=5 // pred_check_branch
        %534 = sbr.rel (%p532) target = $region76
      $region75: #{tpu_custom_call.1} parent=5 // pred_region
        %s535 = ssub.s32 %s19, 2
      $region76: #{tpu_custom_call.1} parent=5 // pred_fallthru
        _
    $region6: #{tpu_custom_call.1} parent=1 // loop_footer
      %s23 = sadd.s32 1, %s19
    $region7: #{tpu_custom_call.1} parent=1 // loop_footer_branch
      %18 = sbr.rel target = $region3
    $region8: #{tpu_custom_call.1} parent=1 // loop_exit
      _
    %536 = vsyncpa [#allocation4], 1
    %s537 = scalar_lea.sflag [#allocation4], 1
    %538 = vsyncpa %s537, 1
    %539 = vsyncpa [#allocation7], 1
    %s540 = scalar_lea.sflag [#allocation7], 1
    %541 = vsyncpa %s540, 1
    %542 = vsyncpa [#allocation10], 1
    %s543 = scalar_lea.sflag [#allocation10], 1
    %544 = vsyncpa %s543, 1
    %545 = vsyncpa [#allocation5], 1
    %s546 = scalar_lea.sflag [#allocation5], 1
    %547 = vsyncpa %s546, 1

</llo_original>
